<compile_context>
chip_gen: v7x
topology: tpu7x:2x2x1
jax: 0.10.0
libtpu: 0.0.40
codegen_flags: <defaults>
</compile_context>

<pallas_src>
import numpy as np
import jax
import jax.numpy as jnp
from jax import lax
from jax.experimental import pallas as pl
from jax.experimental.pallas import tpu as pltpu

# ---------------- problem sizes (small, consistent with the module) ----------
N, Cin, H, W = 2, 4, 16, 16
Chid = 8
Ncls = 3
KH = KW = 3
STRIDE = 2
Ho, Wo = H // STRIDE, W // STRIDE            # model output spatial size (8, 8)
K9C = KH * KW * Cin                          # 36 (im2col contraction dim)


# ---------------- Pallas kernels ---------------------------------------------
def fused_kernel(p_ref, y_ref, w1_ref, b1_ref, w2_ref, b2_ref, kT_ref,
                 out_ref, loss_ref):
    """Fused: conv3x3(s2) + ReLU + conv1x1  ->  bilinear upsample (Kronecker
    matmul)  ->  BCE-with-logits sum.  Everything stays in VMEM; the only
    stores are the lane-dense (Ncls, Hl*Wl) output tiles and a scalar loss."""
    inv_count = 1.0 / (out_ref.shape[0] * out_ref.shape[1] * out_ref.shape[2])
    total = jnp.float32(0.0)
    for n in range(N):                       # N = 2, static unroll
        # conv3x3 stride-2 as transposed im2col matmul: (Chid,36)@(36,64)
        h = jnp.dot(w1_ref[...], p_ref[n],
                    preferred_element_type=jnp.float32) + b1_ref[...]
        h = jnp.maximum(h, 0.0)
        # 1x1 conv: (Ncls,Chid)@(Chid,64) -> logits_T (Ncls, 64)
        lt = jnp.dot(w2_ref[...], h,
                     preferred_element_type=jnp.float32) + b2_ref[...]
        # bilinear resize folded into one matmul: (Ncls,64)@(64,256)
        up = jnp.dot(lt, kT_ref[...], preferred_element_type=jnp.float32)
        out_ref[n] = up                                     # lane-dense store
        # BCEWithLogitsLoss: max(x,0) - x*y + log(1+exp(-|x|))
        # (log1p would be marginally more precise for huge |x|; negligible here)
        y = y_ref[n]
        bce = jnp.maximum(up, 0.0) - up * y + jnp.log(1.0 + jnp.exp(-jnp.abs(up)))
        total = total + jnp.sum(bce)
    loss_ref[0] = total * inv_count


def head_kernel(p_ref, w1_ref, b1_ref, w2_ref, b2_ref, o_ref):
    """Inference path (labels is None): just the segmentation head."""
    for n in range(N):
        h = jnp.maximum(jnp.dot(w1_ref[...], p_ref[n],
                                preferred_element_type=jnp.float32)
                        + b1_ref[...], 0.0)
        o_ref[n] = jnp.dot(w2_ref[...], h,
                           preferred_element_type=jnp.float32) + b2_ref[...]


# ---------------- JAX glue ----------------------------------------------------
def im2col_T(x):
    """x: (N,Cin,H,W) -> (N, Cin*KH*KW, Ho*Wo); pad=1, stride=2.
    Row index order is (ci, kh, kw), matching w1.reshape(Chid, Cin*KH*KW)."""
    xp = jnp.pad(x, ((0, 0), (0, 0), (1, 1), (1, 1)))
    cols = [xp[:, :, kh:kh + STRIDE * Ho:STRIDE, kw:kw + STRIDE * Wo:STRIDE]
            for kh in range(KH) for kw in range(KW)]
    p = jnp.stack(cols, axis=2)                   # (N, Cin, 9, Ho, Wo)
    return p.reshape(N, K9C, Ho * Wo)             # (N, 36, 64)


def interp_matrix(out_size, in_size):
    """Row-interpolation matrix for F.interpolate(mode='bilinear',
    align_corners=False): out = M @ in, M shape (out_size, in_size)."""
    scale = in_size / out_size
    i = np.arange(out_size, dtype=np.float64)
    src = np.maximum((i + 0.5) * scale - 0.5, 0.0)
    i0 = np.minimum(np.floor(src).astype(np.int64), in_size - 1)
    i1 = np.minimum(i0 + 1, in_size - 1)
    lam = src - i0
    M = np.zeros((out_size, in_size), dtype=np.float64)
    M[np.arange(out_size), i0] += 1.0 - lam
    M[np.arange(out_size), i1] += lam
    return M.astype(np.float32)


def upsample_kron_T(hl, wl):
    """K = kron(Wh, Ww): (hl*wl, Ho*Wo). Returns K.T (Ho*Wo, hl*wl) so the
    kernel computes up_flat = logits_flat @ K.T in one lane-dense matmul.
    (If sizes match, this degenerates to the identity — same semantics as the
    size-check branch in the PyTorch forward.)"""
    Wh = interp_matrix(hl, Ho)
    Ww = interp_matrix(wl, Wo)
    return jnp.asarray(np.kron(Wh, Ww).T, dtype=jnp.float32)


def smp_forward(images, labels, params):
    """Equivalent of SmpModel.forward(images, labels) -> (outputs, loss)."""
    w1T, b1c, w2T, b2c = params
    patches = im2col_T(images)                                # (N, 36, 64)

    if labels is None:
        logits = pl.pallas_call(
            head_kernel,
            out_shape=jax.ShapeDtypeStruct((N, Ncls, Ho * Wo), jnp.float32),
        )(patches, w1T, b1c, w2T, b2c)
        return logits.reshape(N, Ncls, Ho, Wo)

    Hl, Wl = labels.shape[-2], labels.shape[-1]
    kT = upsample_kron_T(Hl, Wl)                              # (64, Hl*Wl)
    y_flat = labels.reshape(N, Ncls, Hl * Wl)                 # lane-dense

    outputs_flat, loss = pl.pallas_call(
        fused_kernel,
        out_shape=(jax.ShapeDtypeStruct((N, Ncls, Hl * Wl), jnp.float32),
                   jax.ShapeDtypeStruct((1,), jnp.float32)),
        out_specs=(pl.BlockSpec(memory_space=pltpu.MemorySpace.VMEM),
                   pl.BlockSpec(memory_space=pltpu.MemorySpace.SMEM)),
    )(patches, y_flat, w1T, b1c, w2T, b2c, kT)

    outputs = outputs_flat.reshape(N, Ncls, Hl, Wl)
    return outputs, loss[0]


# ---------------- deterministic params / inputs -------------------------------
def make_params():
    k = jax.random.PRNGKey(0)
    k1, k2, k3, k4 = jax.random.split(k, 4)
    # PyTorch conv weight layouts, then reshaped for the transposed im2col matmul.
    w1 = jax.random.normal(k1, (Chid, Cin, KH, KW), jnp.float32) * 0.1
    b1 = jax.random.normal(k2, (Chid,), jnp.float32) * 0.1
    w2 = jax.random.normal(k3, (Ncls, Chid, 1, 1), jnp.float32) * 0.1
    b2 = jax.random.normal(k4, (Ncls,), jnp.float32) * 0.1
    w1T = w1.reshape(Chid, K9C)                  # (Chid, 36), idx (ci, kh, kw)
    w2T = w2.reshape(Ncls, Chid)                 # (Ncls, Chid)
    kernel_params = (w1T, b1.reshape(Chid, 1), w2T, b2.reshape(Ncls, 1))
    return kernel_params, (w1, b1, w2, b2)


def reference_forward(images, labels, torch_params):
    """Pure-JAX reference of the same forward (sanity check)."""
    w1, b1, w2, b2 = torch_params
    h = lax.conv_general_dilated(
        images, w1, window_strides=(STRIDE, STRIDE),
        padding=((1, 1), (1, 1)),
        dimension_numbers=("NCHW", "OIHW", "NCHW"))
    h = jnp.maximum(h + b1[None, :, None, None], 0.0)
    logits = jnp.einsum("nchw,oc->nohw", h, w2.reshape(Ncls, Chid)) \
        + b2[None, :, None, None]
    Hl, Wl = labels.shape[-2], labels.shape[-1]
    Wh = jnp.asarray(interp_matrix(Hl, Ho))
    Ww = jnp.asarray(interp_matrix(Wl, Wo))
    up = jnp.einsum("hp,ncpq,wq->nchw", Wh, logits, Ww)
    bce = jnp.maximum(up, 0.0) - up * labels + jnp.log(1.0 + jnp.exp(-jnp.abs(up)))
    return up, jnp.mean(bce), logits


if __name__ == "__main__":
    params, torch_params = make_params()
    kx, ky = jax.random.split(jax.random.PRNGKey(0), 2)
    images = jax.random.normal(kx, (N, Cin, H, W), jnp.float32)
    labels = (jax.random.uniform(ky, (N, Ncls, H, W)) > 0.5).astype(jnp.float32)

    # training path (images, labels) -> (outputs, loss)
    outputs, loss = smp_forward(images, labels, params)
    outputs, loss = jax.block_until_ready((outputs, loss))

    # inference path (labels=None) -> raw model output
    logits_only = jax.block_until_ready(smp_forward(images, None, params))

    ref_out, ref_loss, ref_logits = reference_forward(images, labels, torch_params)
    assert outputs.shape == (N, Ncls, H, W)
    assert logits_only.shape == (N, Ncls, Ho, Wo)
    assert np.allclose(np.asarray(outputs), np.asarray(ref_out),
                       rtol=1e-2, atol=1e-2)
    assert np.allclose(np.asarray(logits_only), np.asarray(ref_logits),
                       rtol=1e-2, atol=1e-2)
    assert np.allclose(float(loss), float(ref_loss), rtol=1e-2, atol=1e-2)

    print("KERNEL_OK")
</pallas_src>

<mosaic_0001>
module attributes {stable_mosaic.version = 11 : i64} {
  func.func @fused_kernel(%arg0: memref<2x36x64xf32, #tpu.memory_space<vmem>>, %arg1: memref<2x3x256xf32, #tpu.memory_space<vmem>>, %arg2: memref<8x36xf32, #tpu.memory_space<vmem>>, %arg3: memref<8x1xf32, #tpu.memory_space<vmem>>, %arg4: memref<3x8xf32, #tpu.memory_space<vmem>>, %arg5: memref<3x1xf32, #tpu.memory_space<vmem>>, %arg6: memref<64x256xf32, #tpu.memory_space<vmem>>, %arg7: memref<2x3x256xf32, #tpu.memory_space<vmem>>, %arg8: memref<1xf32, #tpu.memory_space<smem>>) attributes {dimension_semantics = [], scalar_prefetch = 0 : i64, scratch_operands = 0 : i64, tpu.core_type = #tpu.core_type<tc>} {
    %c0 = arith.constant 0 : index
    %c0_0 = arith.constant 0 : index
    %0 = vector.load %arg2[%c0, %c0_0] : memref<8x36xf32, #tpu.memory_space<vmem>>, vector<8x36xf32>
    %c0_1 = arith.constant 0 : index
    %c0_2 = arith.constant 0 : index
    %c0_3 = arith.constant 0 : index
    %1 = vector.load %arg0[%c0_1, %c0_2, %c0_3] : memref<2x36x64xf32, #tpu.memory_space<vmem>>, vector<1x36x64xf32>
    %2 = vector.shape_cast %1 : vector<1x36x64xf32> to vector<36x64xf32>
    %cst = arith.constant dense<0.000000e+00> : vector<8x64xf32>
    %3 = tpu.matmul %0, %2, %cst {dimension_numbers = #tpu.dot_dimension_numbers<[1], [0], [0], [1], [0, 0, 1, 1], [], []>} : vector<8x36xf32>, vector<36x64xf32>, vector<8x64xf32> -> vector<8x64xf32>
    %c0_4 = arith.constant 0 : index
    %c0_5 = arith.constant 0 : index
    %4 = vector.load %arg3[%c0_4, %c0_5] : memref<8x1xf32, #tpu.memory_space<vmem>>, vector<8x1xf32>
    %5 = vector.broadcast %4 : vector<8x1xf32> to vector<8x64xf32>
    %6 = arith.addf %3, %5 : vector<8x64xf32>
    %cst_6 = arith.constant 0.000000e+00 : f32
    %7 = vector.broadcast %cst_6 : f32 to vector<8x64xf32>
    %8 = arith.maximumf %6, %7 : vector<8x64xf32>
    %c0_7 = arith.constant 0 : index
    %c0_8 = arith.constant 0 : index
    %9 = vector.load %arg4[%c0_7, %c0_8] : memref<3x8xf32, #tpu.memory_space<vmem>>, vector<3x8xf32>
    %cst_9 = arith.constant dense<0.000000e+00> : vector<3x64xf32>
    %10 = tpu.matmul %9, %8, %cst_9 {dimension_numbers = #tpu.dot_dimension_numbers<[1], [0], [0], [1], [0, 0, 1, 1], [], []>} : vector<3x8xf32>, vector<8x64xf32>, vector<3x64xf32> -> vector<3x64xf32>
    %c0_10 = arith.constant 0 : index
    %c0_11 = arith.constant 0 : index
    %11 = vector.load %arg5[%c0_10, %c0_11] : memref<3x1xf32, #tpu.memory_space<vmem>>, vector<3x1xf32>
    %12 = vector.broadcast %11 : vector<3x1xf32> to vector<3x64xf32>
    %13 = arith.addf %10, %12 : vector<3x64xf32>
    %c0_12 = arith.constant 0 : index
    %c0_13 = arith.constant 0 : index
    %14 = vector.load %arg6[%c0_12, %c0_13] : memref<64x256xf32, #tpu.memory_space<vmem>>, vector<64x256xf32>
    %cst_14 = arith.constant dense<0.000000e+00> : vector<3x256xf32>
    %15 = tpu.matmul %13, %14, %cst_14 {dimension_numbers = #tpu.dot_dimension_numbers<[1], [0], [0], [1], [0, 0, 1, 1], [], []>} : vector<3x64xf32>, vector<64x256xf32>, vector<3x256xf32> -> vector<3x256xf32>
    %c0_15 = arith.constant 0 : index
    %c0_16 = arith.constant 0 : index
    %c0_17 = arith.constant 0 : index
    %16 = vector.load %arg7[%c0_15, %c0_16, %c0_17] : memref<2x3x256xf32, #tpu.memory_space<vmem>>, vector<1x3x256xf32>
    %17 = vector.shape_cast %16 : vector<1x3x256xf32> to vector<3x256xf32>
    %18 = vector.shape_cast %15 : vector<3x256xf32> to vector<1x3x256xf32>
    tpu.vector_store %arg7[%c0_15, %c0_16, %c0_17], %18 {strides = array<i32>} : memref<2x3x256xf32, #tpu.memory_space<vmem>>, vector<1x3x256xf32>,
    %c0_18 = arith.constant 0 : index
    %c0_19 = arith.constant 0 : index
    %c0_20 = arith.constant 0 : index
    %19 = vector.load %arg1[%c0_18, %c0_19, %c0_20] : memref<2x3x256xf32, #tpu.memory_space<vmem>>, vector<1x3x256xf32>
    %20 = vector.shape_cast %19 : vector<1x3x256xf32> to vector<3x256xf32>
    %cst_21 = arith.constant 0.000000e+00 : f32
    %21 = vector.broadcast %cst_21 : f32 to vector<3x256xf32>
    %22 = arith.maximumf %15, %21 : vector<3x256xf32>
    %23 = arith.mulf %15, %20 : vector<3x256xf32>
    %24 = arith.subf %22, %23 : vector<3x256xf32>
    %25 = math.absf %15 : vector<3x256xf32>
    %cst_22 = arith.constant 0.000000e+00 : f32
    %26 = vector.broadcast %cst_22 : f32 to vector<3x256xf32>
    %27 = arith.subf %26, %25 : vector<3x256xf32>
    %28 = math.exp %27 : vector<3x256xf32>
    %cst_23 = arith.constant 1.000000e+00 : f32
    %29 = vector.broadcast %cst_23 : f32 to vector<3x256xf32>
    %30 = arith.addf %29, %28 : vector<3x256xf32>
    %31 = math.log %30 : vector<3x256xf32>
    %32 = arith.addf %24, %31 : vector<3x256xf32>
    %33 = vector.shape_cast %32 : vector<3x256xf32> to vector<1x3x256xf32>
    %cst_24 = arith.constant dense<0.000000e+00> : vector<1xf32>
    %34 = vector.multi_reduction <add>, %33, %cst_24 [1, 2] : vector<1x3x256xf32> to vector<1xf32>
    %35 = vector.shape_cast %34 : vector<1xf32> to vector<1x1x1xf32>
    %36 = vector.extract %35[0, 0, 0] : f32 from vector<1x1x1xf32>
    %cst_25 = arith.constant 0.000000e+00 : f32
    %37 = arith.addf %cst_25, %36 : f32
    %c0_26 = arith.constant 0 : index
    %c0_27 = arith.constant 0 : index
    %38 = vector.load %arg2[%c0_26, %c0_27] : memref<8x36xf32, #tpu.memory_space<vmem>>, vector<8x36xf32>
    %c1 = arith.constant 1 : index
    %c0_28 = arith.constant 0 : index
    %c0_29 = arith.constant 0 : index
    %39 = vector.load %arg0[%c1, %c0_28, %c0_29] : memref<2x36x64xf32, #tpu.memory_space<vmem>>, vector<1x36x64xf32>
    %40 = vector.shape_cast %39 : vector<1x36x64xf32> to vector<36x64xf32>
    %cst_30 = arith.constant dense<0.000000e+00> : vector<8x64xf32>
    %41 = tpu.matmul %38, %40, %cst_30 {dimension_numbers = #tpu.dot_dimension_numbers<[1], [0], [0], [1], [0, 0, 1, 1], [], []>} : vector<8x36xf32>, vector<36x64xf32>, vector<8x64xf32> -> vector<8x64xf32>
    %c0_31 = arith.constant 0 : index
    %c0_32 = arith.constant 0 : index
    %42 = vector.load %arg3[%c0_31, %c0_32] : memref<8x1xf32, #tpu.memory_space<vmem>>, vector<8x1xf32>
    %43 = vector.broadcast %42 : vector<8x1xf32> to vector<8x64xf32>
    %44 = arith.addf %41, %43 : vector<8x64xf32>
    %cst_33 = arith.constant 0.000000e+00 : f32
    %45 = vector.broadcast %cst_33 : f32 to vector<8x64xf32>
    %46 = arith.maximumf %44, %45 : vector<8x64xf32>
    %c0_34 = arith.constant 0 : index
    %c0_35 = arith.constant 0 : index
    %47 = vector.load %arg4[%c0_34, %c0_35] : memref<3x8xf32, #tpu.memory_space<vmem>>, vector<3x8xf32>
    %cst_36 = arith.constant dense<0.000000e+00> : vector<3x64xf32>
    %48 = tpu.matmul %47, %46, %cst_36 {dimension_numbers = #tpu.dot_dimension_numbers<[1], [0], [0], [1], [0, 0, 1, 1], [], []>} : vector<3x8xf32>, vector<8x64xf32>, vector<3x64xf32> -> vector<3x64xf32>
    %c0_37 = arith.constant 0 : index
    %c0_38 = arith.constant 0 : index
    %49 = vector.load %arg5[%c0_37, %c0_38] : memref<3x1xf32, #tpu.memory_space<vmem>>, vector<3x1xf32>
    %50 = vector.broadcast %49 : vector<3x1xf32> to vector<3x64xf32>
    %51 = arith.addf %48, %50 : vector<3x64xf32>
    %c0_39 = arith.constant 0 : index
    %c0_40 = arith.constant 0 : index
    %52 = vector.load %arg6[%c0_39, %c0_40] : memref<64x256xf32, #tpu.memory_space<vmem>>, vector<64x256xf32>
    %cst_41 = arith.constant dense<0.000000e+00> : vector<3x256xf32>
    %53 = tpu.matmul %51, %52, %cst_41 {dimension_numbers = #tpu.dot_dimension_numbers<[1], [0], [0], [1], [0, 0, 1, 1], [], []>} : vector<3x64xf32>, vector<64x256xf32>, vector<3x256xf32> -> vector<3x256xf32>
    %c1_42 = arith.constant 1 : index
    %c0_43 = arith.constant 0 : index
    %c0_44 = arith.constant 0 : index
    %54 = vector.load %arg7[%c1_42, %c0_43, %c0_44] : memref<2x3x256xf32, #tpu.memory_space<vmem>>, vector<1x3x256xf32>
    %55 = vector.shape_cast %54 : vector<1x3x256xf32> to vector<3x256xf32>
    %56 = vector.shape_cast %53 : vector<3x256xf32> to vector<1x3x256xf32>
    tpu.vector_store %arg7[%c1_42, %c0_43, %c0_44], %56 {strides = array<i32>} : memref<2x3x256xf32, #tpu.memory_space<vmem>>, vector<1x3x256xf32>,
    %c1_45 = arith.constant 1 : index
    %c0_46 = arith.constant 0 : index
    %c0_47 = arith.constant 0 : index
    %57 = vector.load %arg1[%c1_45, %c0_46, %c0_47] : memref<2x3x256xf32, #tpu.memory_space<vmem>>, vector<1x3x256xf32>
    %58 = vector.shape_cast %57 : vector<1x3x256xf32> to vector<3x256xf32>
    %cst_48 = arith.constant 0.000000e+00 : f32
    %59 = vector.broadcast %cst_48 : f32 to vector<3x256xf32>
    %60 = arith.maximumf %53, %59 : vector<3x256xf32>
    %61 = arith.mulf %53, %58 : vector<3x256xf32>
    %62 = arith.subf %60, %61 : vector<3x256xf32>
    %63 = math.absf %53 : vector<3x256xf32>
    %cst_49 = arith.constant 0.000000e+00 : f32
    %64 = vector.broadcast %cst_49 : f32 to vector<3x256xf32>
    %65 = arith.subf %64, %63 : vector<3x256xf32>
    %66 = math.exp %65 : vector<3x256xf32>
    %cst_50 = arith.constant 1.000000e+00 : f32
    %67 = vector.broadcast %cst_50 : f32 to vector<3x256xf32>
    %68 = arith.addf %67, %66 : vector<3x256xf32>
    %69 = math.log %68 : vector<3x256xf32>
    %70 = arith.addf %62, %69 : vector<3x256xf32>
    %71 = vector.shape_cast %70 : vector<3x256xf32> to vector<1x3x256xf32>
    %cst_51 = arith.constant dense<0.000000e+00> : vector<1xf32>
    %72 = vector.multi_reduction <add>, %71, %cst_51 [1, 2] : vector<1x3x256xf32> to vector<1xf32>
    %73 = vector.shape_cast %72 : vector<1xf32> to vector<1x1x1xf32>
    %74 = vector.extract %73[0, 0, 0] : f32 from vector<1x1x1xf32>
    %75 = arith.addf %37, %74 : f32
    %cst_52 = arith.constant 6.51041686E-4 : f32
    %76 = arith.mulf %75, %cst_52 : f32
    %c0_53 = arith.constant 0 : index
    %77 = memref.load %arg8[%c0_53] : memref<1xf32, #tpu.memory_space<smem>>
    memref.store %76, %arg8[%c0_53] : memref<1xf32, #tpu.memory_space<smem>>
    return
  }
}

</mosaic_0001>

<llo_original>
// kernel: tpu_custom_call.1
$region0: #{tpu_custom_call.1}
  #allocation0 [shape = 'u32[]', space=smem, size = 0x4, offset = 0x4, fixed_abs, tag = 'smem constant byte address 0x4 - core index']
  #allocation1 [shape = 'u32[144,128]{1,0:T(1,128)}', space=vmem, size = 0x12000, scoped, tag = 'internal scratch']
  %s0 = inlined_call_operand.vmem [shape: f32[2,36,64], index: 0, kind: input, shape index: {}]
  %s1 = inlined_call_operand.vmem [shape: f32[2,3,256], index: 1, kind: input, shape index: {}]
  %s2 = inlined_call_operand.vmem [shape: f32[8,36], index: 2, kind: input, shape index: {}]
  %s3 = inlined_call_operand.vmem [shape: f32[8,1], index: 3, kind: input, shape index: {}]
  %s4 = inlined_call_operand.vmem [shape: f32[3,8], index: 4, kind: input, shape index: {}]
  %s5 = inlined_call_operand.vmem [shape: f32[3,1], index: 5, kind: input, shape index: {}]
  %s6 = inlined_call_operand.vmem [shape: f32[64,256], index: 6, kind: input, shape index: {}]
  %s7 = inlined_call_operand.vmem [shape: f32[2,3,256], index: 7, kind: output, shape index: {0}]
  %s8 = inlined_call_operand.hbm [shape: f32[1], index: 8, kind: output, shape index: {1}]
  %9 = xla_tuple %s7, %s8
  %s10 = sld [smem:[#allocation0]]
  $region46: #{tpu_custom_call.1} parent=0
    _
  %s12 = ssub.s32 1, %s10
  %s13 = scalar_select 0, %s12, %s10
  $region1: #{tpu_custom_call.1} parent=0
    #allocation2 [shape = 'u8[512]{0}', space=smem, size = 0x200, scoped, tag = 'output window, operand 1, single buffered']
    #allocation3 [shape = 's32[1]{0}', space=sflag, size = 0x4, scoped, tag = 'scoped memory for tpu_custom_call.1']
    %14 = vsyncpa [#allocation3], 0
    // Predicated region
    $region2: #{tpu_custom_call.1} parent=1 // pred_check
      _
    $region3: #{tpu_custom_call.1} parent=1 // pred_check_branch
      %16 = sbr.rel (0) target = $region5
    $region4: #{tpu_custom_call.1} parent=1 // pred_region
      _
    $region5: #{tpu_custom_call.1} parent=1 // pred_fallthru
      _
    // Predicated region
    $region6: #{tpu_custom_call.1} parent=1 // pred_check
      _
    $region7: #{tpu_custom_call.1} parent=1 // pred_check_branch
      %18 = sbr.rel (0) target = $region9
    $region8: #{tpu_custom_call.1} parent=1 // pred_region
      _
    $region9: #{tpu_custom_call.1} parent=1 // pred_fallthru
      _
    // Predicated region
    $region10: #{tpu_custom_call.1} parent=1 // pred_check
      _
    $region11: #{tpu_custom_call.1} parent=1 // pred_check_branch
      %20 = sbr.rel (0) target = $region13
    $region12: #{tpu_custom_call.1} parent=1 // pred_region
      _
    $region13: #{tpu_custom_call.1} parent=1 // pred_fallthru
      _
    // Predicated region
    $region14: #{tpu_custom_call.1} parent=1 // pred_check
      _
    $region15: #{tpu_custom_call.1} parent=1 // pred_check_branch
      %22 = sbr.rel (0) target = $region17
    $region16: #{tpu_custom_call.1} parent=1 // pred_region
      _
    $region17: #{tpu_custom_call.1} parent=1 // pred_fallthru
      _
    // Predicated region
    $region18: #{tpu_custom_call.1} parent=1 // pred_check
      _
    $region19: #{tpu_custom_call.1} parent=1 // pred_check_branch
      %24 = sbr.rel (0) target = $region21
    $region20: #{tpu_custom_call.1} parent=1 // pred_region
      _
    $region21: #{tpu_custom_call.1} parent=1 // pred_fallthru
      _
    // Predicated region
    $region22: #{tpu_custom_call.1} parent=1 // pred_check
      _
    $region23: #{tpu_custom_call.1} parent=1 // pred_check_branch
      %26 = sbr.rel (0) target = $region25
    $region24: #{tpu_custom_call.1} parent=1 // pred_region
      _
    $region25: #{tpu_custom_call.1} parent=1 // pred_fallthru
      _
    // Predicated region
    $region26: #{tpu_custom_call.1} parent=1 // pred_check
      _
    $region27: #{tpu_custom_call.1} parent=1 // pred_check_branch
      %28 = sbr.rel (0) target = $region29
    $region28: #{tpu_custom_call.1} parent=1 // pred_region
      _
    $region29: #{tpu_custom_call.1} parent=1 // pred_fallthru
      _
    %v29 = vld [vmem:[%s2] sm:$0xff]
    %v30 = vld [vmem:[%s0] sm:$0xff]
    %v31 = vld [vmem:[%s0 + $0x8] sm:$0xff]
    %v32 = vld [vmem:[%s0 + $0x10] sm:$0xff]
    %v33 = vld [vmem:[%s0 + $0x18] sm:$0xff]
    %v34 = vld [vmem:[%s0 + $0x20] sm:$0xf]
    %v35 = vld [vmem:[%s3] sm:$0xff]
    %37 = vset.pattern.permute.xlu0 0
    %38 = vperm.xlu0 %37, %v35
    %v39 = vpop.permute.xlu0 %38
    %vm41 = vcmask 293888
    %v43 = vsel %vm41, %v29, 0
    %vm45 = vcmask 1043456
    %v47 = vsel %vm45, %v34, 0
    %49 = vmatprep.subr.mxu0 0.0
    %50 = vmatpush1.msra.mxu0 %v30
    %51 = vmatprep.subr.mxu0 0.0
    %52 = vmatpush1.msra.mxu0 %v31
    %53 = vmatprep.subr.mxu0 0.0
    %54 = vmatpush1.msra.mxu0 %v32
    %55 = vmatprep.subr.mxu0 0.0
    %56 = vmatpush1.msra.mxu0 %v33
    %57 = vmatprep.subr.mxu0 0.0
    %58 = vmatpush1.msra.mxu0 %v47
    %59 = vmatprep.subr.mxu0 0.0
    %60 = vmatpush1.msra.mxu0 0.0
    %61 = vmatprep.subr.mxu0 0.0
    %62 = vmatpush1.msra.mxu0 0.0
    %63 = vmatprep.subr.mxu0 0.0
    %64 = vmatpush1.msra.mxu0 0.0
    %65 = vmatprep.subr.mxu0 0.0
    %66 = vmatpush1.msra.mxu0 0.0
    %67 = vmatprep.subr.mxu0 0.0
    %68 = vmatpush1.msra.mxu0 0.0
    %69 = vmatprep.subr.mxu0 0.0
    %70 = vmatpush1.msra.mxu0 0.0
    %71 = vmatprep.subr.mxu0 0.0
    %72 = vmatpush1.msra.mxu0 0.0
    %73 = vmatprep.subr.mxu0 0.0
    %74 = vmatpush1.msra.mxu0 0.0
    %75 = vmatprep.subr.mxu0 0.0
    %76 = vmatpush1.msra.mxu0 0.0
    %77 = vmatprep.subr.mxu0 0.0
    %78 = vmatpush1.msra.mxu0 0.0
    %79 = vmatprep.subr.mxu0 0.0
    %80 = vmatpush1.msra.mxu0 0.0
    %81 = vmatprep.subr.mxu0 0.0
    %82 = vmatpush1.msra.mxu0 0.0
    %83 = vmatprep.subr.mxu0 0.0
    %84 = vmatpush1.msra.mxu0 0.0
    %85 = vmatprep.subr.mxu0 0.0
    %86 = vmatpush1.msra.mxu0 0.0
    %87 = vmatprep.subr.mxu0 0.0
    %88 = vmatpush1.msra.mxu0 0.0
    %89 = vmatprep.subr.mxu0 0.0
    %90 = vmatpush1.msra.mxu0 0.0
    %91 = vmatprep.subr.mxu0 0.0
    %92 = vmatpush1.msra.mxu0 0.0
    %93 = vmatprep.subr.mxu0 0.0
    %94 = vmatpush1.msra.mxu0 0.0
    %95 = vmatprep.subr.mxu0 0.0
    %96 = vmatpush1.msra.mxu0 0.0
    %97 = vmatprep.subr.mxu0 0.0
    %98 = vmatpush1.msra.mxu0 0.0
    %99 = vmatprep.subr.mxu0 0.0
    %100 = vmatpush1.msra.mxu0 0.0
    %101 = vmatprep.subr.mxu0 0.0
    %102 = vmatpush1.msra.mxu0 0.0
    %103 = vmatprep.subr.mxu0 0.0
    %104 = vmatpush1.msra.mxu0 0.0
    %105 = vmatprep.subr.mxu0 0.0
    %106 = vmatpush1.msra.mxu0 0.0
    %107 = vmatprep.subr.mxu0 0.0
    %108 = vmatpush1.msra.mxu0 0.0
    %109 = vmatprep.subr.mxu0 0.0
    %110 = vmatpush1.msra.mxu0 0.0
    %111 = vmatprep.subr.mxu0 0.0
    %112 = vmatpush1.msra.mxu0 0.0
    %113 = vmatprep.mubr.f32.mxu0 0.0
    %114 = vmatmul.mubr.f32.gmra.mrb[0].mxu0 %v43
    %v115 = vpop.f32.mrb[0].mxu0
    %v116 = vadd.f32 %v39, %v115
    %v117 = vpop.f32.mrb[0].mxu0
    %118 = vdwg.mxu0
    %v119 = vmax.f32 %v116, 0.0
    %v120 = vld [vmem:[%s4] sm:$0x7]
    %v121 = vld [vmem:[%s5] sm:$0x7]
    %123 = vset.pattern.permute.xlu0 0
    %124 = vperm.xlu0 %123, %v121
    %v125 = vpop.permute.xlu0 %124
    %vm127 = vcmask 64512
    %v129 = vsel %vm127, %v120, 0
    %131 = vmatprep.subr.mxu0 0.0
    %132 = vmatpush1.msra.mxu0 %v119
    %133 = vmatprep.subr.mxu0 0.0
    %134 = vmatpush1.msra.mxu0 0.0
    %135 = vmatprep.subr.mxu0 0.0
    %136 = vmatpush1.msra.mxu0 0.0
    %137 = vmatprep.subr.mxu0 0.0
    %138 = vmatpush1.msra.mxu0 0.0
    %139 = vmatprep.subr.mxu0 0.0
    %140 = vmatpush1.msra.mxu0 0.0
    %141 = vmatprep.subr.mxu0 0.0
    %142 = vmatpush1.msra.mxu0 0.0
    %143 = vmatprep.subr.mxu0 0.0
    %144 = vmatpush1.msra.mxu0 0.0
    %145 = vmatprep.subr.mxu0 0.0
    %146 = vmatpush1.msra.mxu0 0.0
    %147 = vmatprep.subr.mxu0 0.0
    %148 = vmatpush1.msra.mxu0 0.0
    %149 = vmatprep.subr.mxu0 0.0
    %150 = vmatpush1.msra.mxu0 0.0
    %151 = vmatprep.subr.mxu0 0.0
    %152 = vmatpush1.msra.mxu0 0.0
    %153 = vmatprep.subr.mxu0 0.0
    %154 = vmatpush1.msra.mxu0 0.0
    %155 = vmatprep.subr.mxu0 0.0
    %156 = vmatpush1.msra.mxu0 0.0
    %157 = vmatprep.subr.mxu0 0.0
    %158 = vmatpush1.msra.mxu0 0.0
    %159 = vmatprep.subr.mxu0 0.0
    %160 = vmatpush1.msra.mxu0 0.0
    %161 = vmatprep.subr.mxu0 0.0
    %162 = vmatpush1.msra.mxu0 0.0
    %163 = vmatprep.subr.mxu0 0.0
    %164 = vmatpush1.msra.mxu0 0.0
    %165 = vmatprep.subr.mxu0 0.0
    %166 = vmatpush1.msra.mxu0 0.0
    %167 = vmatprep.subr.mxu0 0.0
    %168 = vmatpush1.msra.mxu0 0.0
    %169 = vmatprep.subr.mxu0 0.0
    %170 = vmatpush1.msra.mxu0 0.0
    %171 = vmatprep.subr.mxu0 0.0
    %172 = vmatpush1.msra.mxu0 0.0
    %173 = vmatprep.subr.mxu0 0.0
    %174 = vmatpush1.msra.mxu0 0.0
    %175 = vmatprep.subr.mxu0 0.0
    %176 = vmatpush1.msra.mxu0 0.0
    %177 = vmatprep.subr.mxu0 0.0
    %178 = vmatpush1.msra.mxu0 0.0
    %179 = vmatprep.subr.mxu0 0.0
    %180 = vmatpush1.msra.mxu0 0.0
    %181 = vmatprep.subr.mxu0 0.0
    %182 = vmatpush1.msra.mxu0 0.0
    %183 = vmatprep.subr.mxu0 0.0
    %184 = vmatpush1.msra.mxu0 0.0
    %185 = vmatprep.subr.mxu0 0.0
    %186 = vmatpush1.msra.mxu0 0.0
    %187 = vmatprep.subr.mxu0 0.0
    %188 = vmatpush1.msra.mxu0 0.0
    %189 = vmatprep.subr.mxu0 0.0
    %190 = vmatpush1.msra.mxu0 0.0
    %191 = vmatprep.subr.mxu0 0.0
    %192 = vmatpush1.msra.mxu0 0.0
    %193 = vmatprep.subr.mxu0 0.0
    %194 = vmatpush1.msra.mxu0 0.0
    %195 = vmatprep.mubr.f32.mxu0 0.0
    %196 = vmatmul.mubr.f32.gmra.mrb[0].mxu0 %v129
    %v197 = vpop.f32.mrb[0].mxu0
    %v198 = vadd.f32 %v125, %v197
    %v199 = vpop.f32.mrb[0].mxu0
    %200 = vdwg.mxu0
    %v201 = vld [vmem:[%s6] sm:$0xff]
    %v202 = vld [vmem:[%s6 + $0x8] sm:$0xff]
    %v203 = vld [vmem:[%s6 + $0x10] sm:$0xff]
    %v204 = vld [vmem:[%s6 + $0x18] sm:$0xff]
    %v205 = vld [vmem:[%s6 + $0x20] sm:$0xff]
    %v206 = vld [vmem:[%s6 + $0x28] sm:$0xff]
    %v207 = vld [vmem:[%s6 + $0x30] sm:$0xff]
    %v208 = vld [vmem:[%s6 + $0x38] sm:$0xff]
    %v209 = vld [vmem:[%s6 + $0x40] sm:$0xff]
    %v210 = vld [vmem:[%s6 + $0x48] sm:$0xff]
    %v211 = vld [vmem:[%s6 + $0x50] sm:$0xff]
    %v212 = vld [vmem:[%s6 + $0x58] sm:$0xff]
    %v213 = vld [vmem:[%s6 + $0x60] sm:$0xff]
    %v214 = vld [vmem:[%s6 + $0x68] sm:$0xff]
    %v215 = vld [vmem:[%s6 + $0x70] sm:$0xff]
    %v216 = vld [vmem:[%s6 + $0x78] sm:$0xff]
    %vm217 = vcmask 523264
    %v219 = vsel %vm217, %v198, 0
    %221 = vmatprep.subr.mxu0 %v202
    %222 = vmatpush1.msra.mxu0 %v201
    %223 = vmatprep.subr.mxu0 %v204
    %224 = vmatpush1.msra.mxu0 %v203
    %225 = vmatprep.subr.mxu0 %v206
    %226 = vmatpush1.msra.mxu0 %v205
    %227 = vmatprep.subr.mxu0 %v208
    %228 = vmatpush1.msra.mxu0 %v207
    %229 = vmatprep.subr.mxu0 %v210
    %230 = vmatpush1.msra.mxu0 %v209
    %231 = vmatprep.subr.mxu0 %v212
    %232 = vmatpush1.msra.mxu0 %v211
    %233 = vmatprep.subr.mxu0 %v214
    %234 = vmatpush1.msra.mxu0 %v213
    %235 = vmatprep.subr.mxu0 %v216
    %236 = vmatpush1.msra.mxu0 %v215
    %237 = vmatprep.subr.mxu0 0.0
    %238 = vmatpush1.msra.mxu0 0.0
    %239 = vmatprep.subr.mxu0 0.0
    %240 = vmatpush1.msra.mxu0 0.0
    %241 = vmatprep.subr.mxu0 0.0
    %242 = vmatpush1.msra.mxu0 0.0
    %243 = vmatprep.subr.mxu0 0.0
    %244 = vmatpush1.msra.mxu0 0.0
    %245 = vmatprep.subr.mxu0 0.0
    %246 = vmatpush1.msra.mxu0 0.0
    %247 = vmatprep.subr.mxu0 0.0
    %248 = vmatpush1.msra.mxu0 0.0
    %249 = vmatprep.subr.mxu0 0.0
    %250 = vmatpush1.msra.mxu0 0.0
    %251 = vmatprep.subr.mxu0 0.0
    %252 = vmatpush1.msra.mxu0 0.0
    %253 = vmatprep.subr.mxu0 0.0
    %254 = vmatpush1.msra.mxu0 0.0
    %255 = vmatprep.subr.mxu0 0.0
    %256 = vmatpush1.msra.mxu0 0.0
    %257 = vmatprep.subr.mxu0 0.0
    %258 = vmatpush1.msra.mxu0 0.0
    %259 = vmatprep.subr.mxu0 0.0
    %260 = vmatpush1.msra.mxu0 0.0
    %261 = vmatprep.subr.mxu0 0.0
    %262 = vmatpush1.msra.mxu0 0.0
    %263 = vmatprep.subr.mxu0 0.0
    %264 = vmatpush1.msra.mxu0 0.0
    %265 = vmatprep.subr.mxu0 0.0
    %266 = vmatpush1.msra.mxu0 0.0
    %267 = vmatprep.subr.mxu0 0.0
    %268 = vmatpush1.msra.mxu0 0.0
    %269 = vmatprep.subr.mxu0 0.0
    %270 = vmatpush1.msra.mxu0 0.0
    %271 = vmatprep.subr.mxu0 0.0
    %272 = vmatpush1.msra.mxu0 0.0
    %273 = vmatprep.subr.mxu0 0.0
    %274 = vmatpush1.msra.mxu0 0.0
    %275 = vmatprep.subr.mxu0 0.0
    %276 = vmatpush1.msra.mxu0 0.0
    %277 = vmatprep.subr.mxu0 0.0
    %278 = vmatpush1.msra.mxu0 0.0
    %279 = vmatprep.subr.mxu0 0.0
    %280 = vmatpush1.msra.mxu0 0.0
    %281 = vmatprep.subr.mxu0 0.0
    %282 = vmatpush1.msra.mxu0 0.0
    %283 = vmatprep.subr.mxu0 0.0
    %284 = vmatpush1.msra.mxu0 0.0
    %285 = vmatprep.mubr.f32.mxu0 0.0
    %286 = vmatmul.mubr.f32.gmra.mrb[0].mxu0 %v219
    %v287 = vpop.f32.mrb[0].mxu0
    %v288 = vadd.f32 0.0, %v287
    %v289 = vpop.f32.mrb[0].mxu0
    %v290 = vadd.f32 0.0, %v289
    %291 = vdwg.mxu0
    %v294 = vcombine.low %v288, %v290
    %296 = vst [vmem:[%s7] sm:$0x77] %v294
    %v297 = vld [vmem:[%s1] sm:$0x77]
    %v298 = vmax.f32 %v288, 0.0
    %v299 = vmax.f32 %v290, 0.0
    %v301 = vcombine.high %v297, %v297
    %v303 = vmul.f32 %v288, %v297
    %v304 = vmul.f32 %v290, %v301
    %v305 = vsub.f32 %v298, %v303
    %v306 = vsub.f32 %v299, %v304
    %v307 = vand.u32 2147483647, %v288
    %v308 = vand.u32 2147483647, %v290
    %v309 = vsub.f32 0.0, %v307
    %v310 = vsub.f32 0.0, %v308
    %v311 = vmul.f32 %v309, 1.442695
    %v312 = vpow.pop %v311
    %v313 = vmul.f32 %v310, 1.442695
    %v314 = vpow.pop %v313
    %v315 = vadd.f32 %v312, 1.0
    %v316 = vadd.f32 %v314, 1.0
    %v317 = vlog2.pop %v315
    %v318 = vmul.f32 %v317, 0.6931472
    %v319 = vlog2.pop %v316
    %v320 = vmul.f32 %v319, 0.6931472
    %v321 = vadd.f32 %v305, %v318
    %v322 = vadd.f32 %v306, %v320
    %vm323 = vcmask 1042432
    %v324 = vsel %vm323, %v321, 0.0
    %v325 = vsel %vm323, %v322, 0.0
    %v326 = vadd.f32 %v324, %v325
    %327 = vadd.xlane.f32.xlu0 %v326
    %v328 = vpop.xlane.xlu0 %327
    %v329 = vrot.slane %v328, 4
    %v330 = vadd.f32 %v328, %v329
    %v331 = vrot.slane %v330, 2
    %v332 = vadd.f32 %v330, %v331
    %v333 = vrot.slane %v332, 1
    %v334 = vadd.f32 %v332, %v333
    %s335 = vtos %v334
    %s336 = sadd.f32 %s335, 0.0
    %v337 = vld [vmem:[%s2] sm:$0xff]
    %s338 = scalar_lea.vmem %s0, 40
    %v339 = vld [vmem:[%s338] sm:$0xff]
    %v340 = vld [vmem:[%s338 + $0x8] sm:$0xff]
    %v341 = vld [vmem:[%s338 + $0x10] sm:$0xff]
    %v342 = vld [vmem:[%s338 + $0x18] sm:$0xff]
    %v343 = vld [vmem:[%s338 + $0x20] sm:$0xf]
    %v344 = vld [vmem:[%s3] sm:$0xff]
    %346 = vset.pattern.permute.xlu0 0
    %347 = vperm.xlu0 %346, %v344
    %v348 = vpop.permute.xlu0 %347
    %v351 = vsel %vm41, %v337, 0
    %v354 = vsel %vm45, %v343, 0
    %356 = vmatprep.subr.mxu0 0.0
    %357 = vmatpush1.msra.mxu0 %v339
    %358 = vmatprep.subr.mxu0 0.0
    %359 = vmatpush1.msra.mxu0 %v340
    %360 = vmatprep.subr.mxu0 0.0
    %361 = vmatpush1.msra.mxu0 %v341
    %362 = vmatprep.subr.mxu0 0.0
    %363 = vmatpush1.msra.mxu0 %v342
    %364 = vmatprep.subr.mxu0 0.0
    %365 = vmatpush1.msra.mxu0 %v354
    %366 = vmatprep.subr.mxu0 0.0
    %367 = vmatpush1.msra.mxu0 0.0
    %368 = vmatprep.subr.mxu0 0.0
    %369 = vmatpush1.msra.mxu0 0.0
    %370 = vmatprep.subr.mxu0 0.0
    %371 = vmatpush1.msra.mxu0 0.0
    %372 = vmatprep.subr.mxu0 0.0
    %373 = vmatpush1.msra.mxu0 0.0
    %374 = vmatprep.subr.mxu0 0.0
    %375 = vmatpush1.msra.mxu0 0.0
    %376 = vmatprep.subr.mxu0 0.0
    %377 = vmatpush1.msra.mxu0 0.0
    %378 = vmatprep.subr.mxu0 0.0
    %379 = vmatpush1.msra.mxu0 0.0
    %380 = vmatprep.subr.mxu0 0.0
    %381 = vmatpush1.msra.mxu0 0.0
    %382 = vmatprep.subr.mxu0 0.0
    %383 = vmatpush1.msra.mxu0 0.0
    %384 = vmatprep.subr.mxu0 0.0
    %385 = vmatpush1.msra.mxu0 0.0
    %386 = vmatprep.subr.mxu0 0.0
    %387 = vmatpush1.msra.mxu0 0.0
    %388 = vmatprep.subr.mxu0 0.0
    %389 = vmatpush1.msra.mxu0 0.0
    %390 = vmatprep.subr.mxu0 0.0
    %391 = vmatpush1.msra.mxu0 0.0
    %392 = vmatprep.subr.mxu0 0.0
    %393 = vmatpush1.msra.mxu0 0.0
    %394 = vmatprep.subr.mxu0 0.0
    %395 = vmatpush1.msra.mxu0 0.0
    %396 = vmatprep.subr.mxu0 0.0
    %397 = vmatpush1.msra.mxu0 0.0
    %398 = vmatprep.subr.mxu0 0.0
    %399 = vmatpush1.msra.mxu0 0.0
    %400 = vmatprep.subr.mxu0 0.0
    %401 = vmatpush1.msra.mxu0 0.0
    %402 = vmatprep.subr.mxu0 0.0
    %403 = vmatpush1.msra.mxu0 0.0
    %404 = vmatprep.subr.mxu0 0.0
    %405 = vmatpush1.msra.mxu0 0.0
    %406 = vmatprep.subr.mxu0 0.0
    %407 = vmatpush1.msra.mxu0 0.0
    %408 = vmatprep.subr.mxu0 0.0
    %409 = vmatpush1.msra.mxu0 0.0
    %410 = vmatprep.subr.mxu0 0.0
    %411 = vmatpush1.msra.mxu0 0.0
    %412 = vmatprep.subr.mxu0 0.0
    %413 = vmatpush1.msra.mxu0 0.0
    %414 = vmatprep.subr.mxu0 0.0
    %415 = vmatpush1.msra.mxu0 0.0
    %416 = vmatprep.subr.mxu0 0.0
    %417 = vmatpush1.msra.mxu0 0.0
    %418 = vmatprep.subr.mxu0 0.0
    %419 = vmatpush1.msra.mxu0 0.0
    %420 = vmatprep.mubr.f32.mxu0 0.0
    %421 = vmatmul.mubr.f32.gmra.mrb[0].mxu0 %v351
    %v422 = vpop.f32.mrb[0].mxu0
    %v423 = vadd.f32 %v348, %v422
    %v424 = vpop.f32.mrb[0].mxu0
    %425 = vdwg.mxu0
    %v426 = vmax.f32 %v423, 0.0
    %v427 = vld [vmem:[%s4] sm:$0x7]
    %v428 = vld [vmem:[%s5] sm:$0x7]
    %430 = vset.pattern.permute.xlu0 0
    %431 = vperm.xlu0 %430, %v428
    %v432 = vpop.permute.xlu0 %431
    %v435 = vsel %vm127, %v427, 0
    %437 = vmatprep.subr.mxu0 0.0
    %438 = vmatpush1.msra.mxu0 %v426
    %439 = vmatprep.subr.mxu0 0.0
    %440 = vmatpush1.msra.mxu0 0.0
    %441 = vmatprep.subr.mxu0 0.0
    %442 = vmatpush1.msra.mxu0 0.0
    %443 = vmatprep.subr.mxu0 0.0
    %444 = vmatpush1.msra.mxu0 0.0
    %445 = vmatprep.subr.mxu0 0.0
    %446 = vmatpush1.msra.mxu0 0.0
    %447 = vmatprep.subr.mxu0 0.0
    %448 = vmatpush1.msra.mxu0 0.0
    %449 = vmatprep.subr.mxu0 0.0
    %450 = vmatpush1.msra.mxu0 0.0
    %451 = vmatprep.subr.mxu0 0.0
    %452 = vmatpush1.msra.mxu0 0.0
    %453 = vmatprep.subr.mxu0 0.0
    %454 = vmatpush1.msra.mxu0 0.0
    %455 = vmatprep.subr.mxu0 0.0
    %456 = vmatpush1.msra.mxu0 0.0
    %457 = vmatprep.subr.mxu0 0.0
    %458 = vmatpush1.msra.mxu0 0.0
    %459 = vmatprep.subr.mxu0 0.0
    %460 = vmatpush1.msra.mxu0 0.0
    %461 = vmatprep.subr.mxu0 0.0
    %462 = vmatpush1.msra.mxu0 0.0
    %463 = vmatprep.subr.mxu0 0.0
    %464 = vmatpush1.msra.mxu0 0.0
    %465 = vmatprep.subr.mxu0 0.0
    %466 = vmatpush1.msra.mxu0 0.0
    %467 = vmatprep.subr.mxu0 0.0
    %468 = vmatpush1.msra.mxu0 0.0
    %469 = vmatprep.subr.mxu0 0.0
    %470 = vmatpush1.msra.mxu0 0.0
    %471 = vmatprep.subr.mxu0 0.0
    %472 = vmatpush1.msra.mxu0 0.0
    %473 = vmatprep.subr.mxu0 0.0
    %474 = vmatpush1.msra.mxu0 0.0
    %475 = vmatprep.subr.mxu0 0.0
    %476 = vmatpush1.msra.mxu0 0.0
    %477 = vmatprep.subr.mxu0 0.0
    %478 = vmatpush1.msra.mxu0 0.0
    %479 = vmatprep.subr.mxu0 0.0
    %480 = vmatpush1.msra.mxu0 0.0
    %481 = vmatprep.subr.mxu0 0.0
    %482 = vmatpush1.msra.mxu0 0.0
    %483 = vmatprep.subr.mxu0 0.0
    %484 = vmatpush1.msra.mxu0 0.0
    %485 = vmatprep.subr.mxu0 0.0
    %486 = vmatpush1.msra.mxu0 0.0
    %487 = vmatprep.subr.mxu0 0.0
    %488 = vmatpush1.msra.mxu0 0.0
    %489 = vmatprep.subr.mxu0 0.0
    %490 = vmatpush1.msra.mxu0 0.0
    %491 = vmatprep.subr.mxu0 0.0
    %492 = vmatpush1.msra.mxu0 0.0
    %493 = vmatprep.subr.mxu0 0.0
    %494 = vmatpush1.msra.mxu0 0.0
    %495 = vmatprep.subr.mxu0 0.0
    %496 = vmatpush1.msra.mxu0 0.0
    %497 = vmatprep.subr.mxu0 0.0
    %498 = vmatpush1.msra.mxu0 0.0
    %499 = vmatprep.subr.mxu0 0.0
    %500 = vmatpush1.msra.mxu0 0.0
    %501 = vmatprep.mubr.f32.mxu0 0.0
    %502 = vmatmul.mubr.f32.gmra.mrb[0].mxu0 %v435
    %v503 = vpop.f32.mrb[0].mxu0
    %v504 = vadd.f32 %v432, %v503
    %v505 = vpop.f32.mrb[0].mxu0
    %506 = vdwg.mxu0
    %v507 = vld [vmem:[%s6] sm:$0xff]
    %v508 = vld [vmem:[%s6 + $0x8] sm:$0xff]
    %v509 = vld [vmem:[%s6 + $0x10] sm:$0xff]
    %v510 = vld [vmem:[%s6 + $0x18] sm:$0xff]
    %v511 = vld [vmem:[%s6 + $0x20] sm:$0xff]
    %v512 = vld [vmem:[%s6 + $0x28] sm:$0xff]
    %v513 = vld [vmem:[%s6 + $0x30] sm:$0xff]
    %v514 = vld [vmem:[%s6 + $0x38] sm:$0xff]
    %v515 = vld [vmem:[%s6 + $0x40] sm:$0xff]
    %v516 = vld [vmem:[%s6 + $0x48] sm:$0xff]
    %v517 = vld [vmem:[%s6 + $0x50] sm:$0xff]
    %v518 = vld [vmem:[%s6 + $0x58] sm:$0xff]
    %v519 = vld [vmem:[%s6 + $0x60] sm:$0xff]
    %v520 = vld [vmem:[%s6 + $0x68] sm:$0xff]
    %v521 = vld [vmem:[%s6 + $0x70] sm:$0xff]
    %v522 = vld [vmem:[%s6 + $0x78] sm:$0xff]
    %v524 = vsel %vm217, %v504, 0
    %526 = vmatprep.subr.mxu0 %v508
    %527 = vmatpush1.msra.mxu0 %v507
    %528 = vmatprep.subr.mxu0 %v510
    %529 = vmatpush1.msra.mxu0 %v509
    %530 = vmatprep.subr.mxu0 %v512
    %531 = vmatpush1.msra.mxu0 %v511
    %532 = vmatprep.subr.mxu0 %v514
    %533 = vmatpush1.msra.mxu0 %v513
    %534 = vmatprep.subr.mxu0 %v516
    %535 = vmatpush1.msra.mxu0 %v515
    %536 = vmatprep.subr.mxu0 %v518
    %537 = vmatpush1.msra.mxu0 %v517
    %538 = vmatprep.subr.mxu0 %v520
    %539 = vmatpush1.msra.mxu0 %v519
    %540 = vmatprep.subr.mxu0 %v522
    %541 = vmatpush1.msra.mxu0 %v521
    %542 = vmatprep.subr.mxu0 0.0
    %543 = vmatpush1.msra.mxu0 0.0
    %544 = vmatprep.subr.mxu0 0.0
    %545 = vmatpush1.msra.mxu0 0.0
    %546 = vmatprep.subr.mxu0 0.0
    %547 = vmatpush1.msra.mxu0 0.0
    %548 = vmatprep.subr.mxu0 0.0
    %549 = vmatpush1.msra.mxu0 0.0
    %550 = vmatprep.subr.mxu0 0.0
    %551 = vmatpush1.msra.mxu0 0.0
    %552 = vmatprep.subr.mxu0 0.0
    %553 = vmatpush1.msra.mxu0 0.0
    %554 = vmatprep.subr.mxu0 0.0
    %555 = vmatpush1.msra.mxu0 0.0
    %556 = vmatprep.subr.mxu0 0.0
    %557 = vmatpush1.msra.mxu0 0.0
    %558 = vmatprep.subr.mxu0 0.0
    %559 = vmatpush1.msra.mxu0 0.0
    %560 = vmatprep.subr.mxu0 0.0
    %561 = vmatpush1.msra.mxu0 0.0
    %562 = vmatprep.subr.mxu0 0.0
    %563 = vmatpush1.msra.mxu0 0.0
    %564 = vmatprep.subr.mxu0 0.0
    %565 = vmatpush1.msra.mxu0 0.0
    %566 = vmatprep.subr.mxu0 0.0
    %567 = vmatpush1.msra.mxu0 0.0
    %568 = vmatprep.subr.mxu0 0.0
    %569 = vmatpush1.msra.mxu0 0.0
    %570 = vmatprep.subr.mxu0 0.0
    %571 = vmatpush1.msra.mxu0 0.0
    %572 = vmatprep.subr.mxu0 0.0
    %573 = vmatpush1.msra.mxu0 0.0
    %574 = vmatprep.subr.mxu0 0.0
    %575 = vmatpush1.msra.mxu0 0.0
    %576 = vmatprep.subr.mxu0 0.0
    %577 = vmatpush1.msra.mxu0 0.0
    %578 = vmatprep.subr.mxu0 0.0
    %579 = vmatpush1.msra.mxu0 0.0
    %580 = vmatprep.subr.mxu0 0.0
    %581 = vmatpush1.msra.mxu0 0.0
    %582 = vmatprep.subr.mxu0 0.0
    %583 = vmatpush1.msra.mxu0 0.0
    %584 = vmatprep.subr.mxu0 0.0
    %585 = vmatpush1.msra.mxu0 0.0
    %586 = vmatprep.subr.mxu0 0.0
    %587 = vmatpush1.msra.mxu0 0.0
    %588 = vmatprep.subr.mxu0 0.0
    %589 = vmatpush1.msra.mxu0 0.0
    %590 = vmatprep.mubr.f32.mxu0 0.0
    %591 = vmatmul.mubr.f32.gmra.mrb[0].mxu0 %v524
    %v592 = vpop.f32.mrb[0].mxu0
    %v593 = vadd.f32 0.0, %v592
    %v594 = vpop.f32.mrb[0].mxu0
    %v595 = vadd.f32 0.0, %v594
    %596 = vdwg.mxu0
    %v599 = vcombine.low %v593, %v595
    %s601 = scalar_lea.vmem %s7, 8
    %602 = vst [vmem:[%s601] sm:$0x77] %v599
    %s603 = scalar_lea.vmem %s1, 8
    %v604 = vld [vmem:[%s603] sm:$0x77]
    %v605 = vmax.f32 %v593, 0.0
    %v606 = vmax.f32 %v595, 0.0
    %v608 = vcombine.high %v604, %v604
    %v610 = vmul.f32 %v593, %v604
    %v611 = vmul.f32 %v595, %v608
    %v612 = vsub.f32 %v605, %v610
    %v613 = vsub.f32 %v606, %v611
    %v614 = vand.u32 2147483647, %v593
    %v615 = vand.u32 2147483647, %v595
    %v616 = vsub.f32 0.0, %v614
    %v617 = vsub.f32 0.0, %v615
    %v618 = vmul.f32 %v616, 1.442695
    %v619 = vpow.pop %v618
    %v620 = vmul.f32 %v617, 1.442695
    %v621 = vpow.pop %v620
    %v622 = vadd.f32 %v619, 1.0
    %v623 = vadd.f32 %v621, 1.0
    %v624 = vlog2.pop %v622
    %v625 = vmul.f32 %v624, 0.6931472
    %v626 = vlog2.pop %v623
    %v627 = vmul.f32 %v626, 0.6931472
    %v628 = vadd.f32 %v612, %v625
    %v629 = vadd.f32 %v613, %v627
    %v630 = vsel %vm323, %v628, 0.0
    %v631 = vsel %vm323, %v629, 0.0
    %v632 = vadd.f32 %v630, %v631
    %633 = vadd.xlane.f32.xlu0 %v632
    %v634 = vpop.xlane.xlu0 %633
    %v635 = vrot.slane %v634, 4
    %v636 = vadd.f32 %v634, %v635
    %v637 = vrot.slane %v636, 2
    %v638 = vadd.f32 %v636, %v637
    %v639 = vrot.slane %v638, 1
    %v640 = vadd.f32 %v638, %v639
    %s641 = vtos %v640
    %s642 = sadd.f32 %s336, %s641
    %s643 = smul.f32 %s642, 0.0006510417
    %s644 = scalar_lea.smem [#allocation2], 0
    %645 = sst [smem:[%s644]] %s643
    // Predicated region
    $region30: #{tpu_custom_call.1} parent=1 // pred_check
      _
    $region31: #{tpu_custom_call.1} parent=1 // pred_check_branch
      %647 = sbr.rel (0) target = $region33
    $region32: #{tpu_custom_call.1} parent=1 // pred_region
      _
    $region33: #{tpu_custom_call.1} parent=1 // pred_fallthru
      _
    // Predicated region
    $region34: #{tpu_custom_call.1} parent=1 // pred_check
      _
    $region35: #{tpu_custom_call.1} parent=1 // pred_check_branch
      %649 = sbr.rel (0) target = $region37
    $region36: #{tpu_custom_call.1} parent=1 // pred_region
      %s651 = ssub.s32 16, 16
      %652 = vsyncadd [#allocation3], %s651
      %655 = dma.smem_to_hbm [#allocation2], 16, %s8, [#allocation3]
    $region37: #{tpu_custom_call.1} parent=1 // pred_fallthru
      _
    // Predicated region
    $region38: #{tpu_custom_call.1} parent=1 // pred_check
      _
    $region39: #{tpu_custom_call.1} parent=1 // pred_check_branch
      %657 = sbr.rel (0) target = $region41
    $region40: #{tpu_custom_call.1} parent=1 // pred_region
      _
    $region41: #{tpu_custom_call.1} parent=1 // pred_fallthru
      _
    // Predicated region
    $region42: #{tpu_custom_call.1} parent=1 // pred_check
      _
    $region43: #{tpu_custom_call.1} parent=1 // pred_check_branch
      %659 = sbr.rel (0) target = $region45
    $region44: #{tpu_custom_call.1} parent=1 // pred_region
      %660 = dma.done [#allocation3], 16
    $region45: #{tpu_custom_call.1} parent=1 // pred_fallthru
      _
    %661 = sfence
    %662 = vsyncpa [#allocation3], 1

</llo_original>
